<compile_context>
chip_gen: v7x
topology: tpu7x:2x2x1
jax: 0.10.0
libtpu: 0.0.40
codegen_flags: <defaults>
</compile_context>

<pallas_src>
import functools

import jax
import jax.numpy as jnp
from jax.experimental import pallas as pl
from jax.experimental.pallas import tpu as pltpu


def _round_up(n, m):
    return ((n + m - 1) // m) * m


def _pick_chunk(n):
    # Bound the live conv activation per matmul so the f32 intermediate never
    # grows with H*W (keeps vreg pressure low and VMEM use bounded on v7x).
    for c in (512, 256, 128):
        if n >= c and n % c == 0:
            return c
    return n


# -----------------------------------------------------------------------------
# Fused Pallas kernel: conv3x3(+bias) + ReLU + avg-pool(+scale) + RNN + head
# -----------------------------------------------------------------------------
def _detectnet_kernel(patch_ref, h_ref, wconv_ref, pool_ref, wih_ref, whh_ref,
                      bh_ref, wout_ref, bout_ref, out_ref, hnew_ref, *, chunk):
    """One batch element per grid step.  bf16 matmul operands, f32 accumulate,
    f32 elementwise.

    patch_ref : [N, KP]   bf16  im2col patches (9*C taps + bias col, lane padded)
    h_ref     : [1, HDP]  f32   previous hidden state (zero padded)
    wconv_ref : [KP, FP]  bf16  conv weights stacked on K (+ bias row)
    pool_ref  : [1, N]    bf16  scale / (H*W) pooling row (MXU matvec pool)
    wih_ref   : [FP, HDP] bf16
    whh_ref   : [HDP,HDP] bf16
    bh_ref    : [1, HDP]  f32
    wout_ref  : [HDP, OP] bf16
    bout_ref  : [1, OP]   f32
    out_ref   : [1, OP]   f32   detection output (lane-dense, padded)
    hnew_ref  : [1, HDP]  f32   new hidden state (lane-dense, padded)
    """
    n_rows = patch_ref.shape[0]
    fp = wconv_ref.shape[-1]

    # Conv3x3 + bias + ReLU + global-average-pool (+ DetectNet scale), chunked
    # over output pixels: one lane-dense im2col matmul per chunk followed by a
    # pooling matvec on the MXU.  No iota/mask/XLU reduction, no big live acc.
    feat = jnp.zeros((1, fp), jnp.float32)
    for c0 in range(0, n_rows, chunk):
        a = jnp.dot(patch_ref[c0:c0 + chunk, :], wconv_ref[...],
                    preferred_element_type=jnp.float32)
        a = jnp.maximum(a, 0.0).astype(jnp.bfloat16)          # ReLU
        feat = feat + jnp.dot(pool_ref[:, c0:c0 + chunk], a,
                              preferred_element_type=jnp.float32)

    # RNN cell: h' = tanh(feat @ W_ih + h @ W_hh + b_h)
    pre = (jnp.dot(feat.astype(jnp.bfloat16), wih_ref[...],
                   preferred_element_type=jnp.float32)
           + jnp.dot(h_ref[...].astype(jnp.bfloat16), whh_ref[...],
                     preferred_element_type=jnp.float32)
           + bh_ref[...])
    h_new = jnp.tanh(pre)                                      # [1, HDP] f32
    hnew_ref[...] = h_new

    # Detection head: out = h' @ W_out + b_out
    out_ref[...] = (jnp.dot(h_new.astype(jnp.bfloat16), wout_ref[...],
                            preferred_element_type=jnp.float32)
                    + bout_ref[...])


# -----------------------------------------------------------------------------
# Parameters / hidden-state init (concrete instantiation of the submodules)
# -----------------------------------------------------------------------------
def init_params(key, C=4, F=32, Hd=64, O=8):
    ks = jax.random.split(key, 5)
    s = 0.1
    return dict(
        w_conv=jax.random.normal(ks[0], (3, 3, C, F), jnp.float32) * s,  # HWIO
        b_conv=jax.random.normal(ks[1], (F,), jnp.float32) * s,
        w_ih=jax.random.normal(ks[2], (F, Hd), jnp.float32) * s,
        w_hh=jax.random.normal(ks[3], (Hd, Hd), jnp.float32) * s,
        b_h=jnp.zeros((Hd,), jnp.float32),
        w_out=jax.random.normal(ks[4], (Hd, O), jnp.float32) * s,
        b_out=jnp.zeros((O,), jnp.float32),
    )


def init_rnn_state(sample_size, Hd=64):
    # Mirrors DetectNet.init_rnn_state -> detect_model.init_hidden_state
    return jnp.zeros((sample_size, Hd), jnp.float32)


# -----------------------------------------------------------------------------
# Forward wrapper
# -----------------------------------------------------------------------------
def detectnet_forward(params, x_nchw, hidden, scale=1.0):
    # TODO(synk): rpn_model / detect_model are abstract submodules in the
    # original code; concrete conv-RPN + RNN-head instantiation used here.
    x = jnp.transpose(x_nchw, (0, 2, 3, 1)).astype(jnp.float32)  # NCHW -> NHWC
    B, H, W, C = x.shape
    F = params["w_conv"].shape[-1]
    Hd = params["w_hh"].shape[0]
    O = params["w_out"].shape[-1]
    N = H * W

    K = 9 * C + 1                       # taps * channels + bias column
    KP = _round_up(K, 128)
    FP = _round_up(F, 128)
    HDP = _round_up(Hd, 128)
    OP = _round_up(O, 128)

    # im2col in the wrapper: 9 shifted slices stacked on the lane axis plus a
    # ones column that carries the conv bias -> one lane-dense matmul operand.
    xp = jnp.pad(x, ((0, 0), (1, 1), (1, 1), (0, 0)))            # [B,H+2,W+2,C]
    taps = [xp[:, dy:dy + H, dx:dx + W, :] for dy in range(3) for dx in range(3)]
    patch = jnp.concatenate(taps, axis=-1).reshape(B, N, 9 * C)
    patch = jnp.concatenate([patch, jnp.ones((B, N, 1), jnp.float32)], axis=-1)
    patch = jnp.pad(patch, ((0, 0), (0, 0), (0, KP - K))).astype(jnp.bfloat16)

    # Conv weights as a single [KP, FP] matrix (taps stacked on K, bias row).
    wmat = params["w_conv"].reshape(9 * C, F)
    wmat = jnp.concatenate([wmat, params["b_conv"][None, :]], axis=0)
    wmat = jnp.pad(wmat, ((0, KP - K), (0, FP - F))).astype(jnp.bfloat16)

    # Pooling row: 1/(H*W) mean and DetectNet scale folded together; applied
    # in-kernel as an MXU matvec over the ReLU'd conv activation.
    pool = jnp.full((1, N), scale / (H * W), jnp.float32).astype(jnp.bfloat16)

    w_ih = jnp.pad(params["w_ih"], ((0, FP - F), (0, HDP - Hd))).astype(jnp.bfloat16)
    w_hh = jnp.pad(params["w_hh"], ((0, HDP - Hd), (0, HDP - Hd))).astype(jnp.bfloat16)
    b_h = jnp.pad(params["b_h"], (0, HDP - Hd)).reshape(1, HDP)
    w_out = jnp.pad(params["w_out"], ((0, HDP - Hd), (0, OP - O))).astype(jnp.bfloat16)
    b_out = jnp.pad(params["b_out"], (0, OP - O)).reshape(1, OP)
    h_in = jnp.pad(hidden.astype(jnp.float32),
                   ((0, 0), (0, HDP - Hd))).reshape(B, 1, HDP)

    chunk = _pick_chunk(N)
    kernel = functools.partial(_detectnet_kernel, chunk=chunk)

    def full(shape):
        return pl.BlockSpec(shape, lambda b: (0,) * len(shape))

    cost = pl.CostEstimate(
        flops=B * (2 * N * KP * FP + 2 * N * FP
                   + 2 * FP * HDP + 2 * HDP * HDP + 2 * HDP * OP),
        transcendentals=B * HDP,
        bytes_accessed=(patch.size * 2 + h_in.size * 4 + wmat.size * 2
                        + pool.size * 2 + w_ih.size * 2 + w_hh.size * 2
                        + b_h.size * 4 + w_out.size * 2 + b_out.size * 4
                        + B * (OP + HDP) * 4),
    )

    out_p, hnew_p = pl.pallas_call(
        kernel,
        out_shape=(jax.ShapeDtypeStruct((B, 1, OP), jnp.float32),
                   jax.ShapeDtypeStruct((B, 1, HDP), jnp.float32)),
        grid=(B,),
        in_specs=[
            pl.BlockSpec((None, N, KP), lambda b: (b, 0, 0)),    # im2col patches
            pl.BlockSpec((None, 1, HDP), lambda b: (b, 0, 0)),   # hidden state
            full((KP, FP)),                                      # conv weight (+bias row)
            full((1, N)),                                        # pooling row
            full((FP, HDP)),                                     # w_ih
            full((HDP, HDP)),                                    # w_hh
            full((1, HDP)),                                      # b_h
            full((HDP, OP)),                                     # w_out
            full((1, OP)),                                       # b_out
        ],
        out_specs=(pl.BlockSpec((None, 1, OP), lambda b: (b, 0, 0)),
                   pl.BlockSpec((None, 1, HDP), lambda b: (b, 0, 0))),
        compiler_params=pltpu.CompilerParams(
            dimension_semantics=("parallel",)),
        cost_estimate=cost,
    )(patch, h_in, wmat, pool, w_ih, w_hh, b_h, w_out, b_out)

    return out_p[:, 0, :O], hnew_p[:, 0, :Hd]


# -----------------------------------------------------------------------------
# Pure-JAX reference (for correctness check)
# -----------------------------------------------------------------------------
def reference(params, x_nchw, hidden, scale=1.0):
    x = jnp.transpose(x_nchw, (0, 2, 3, 1)).astype(jnp.float32)
    conv = jax.lax.conv_general_dilated(
        x, params["w_conv"], window_strides=(1, 1), padding="SAME",
        dimension_numbers=("NHWC", "HWIO", "NHWC"))
    conv = jnp.maximum(conv + params["b_conv"], 0.0)
    feat = conv.mean(axis=(1, 2)) * scale
    h_new = jnp.tanh(feat @ params["w_ih"] + hidden @ params["w_hh"]
                     + params["b_h"])
    out = h_new @ params["w_out"] + params["b_out"]
    return out, h_new


if __name__ == "__main__":
    key = jax.random.PRNGKey(0)
    kx, kp = jax.random.split(key, 2)

    B, C, H, W = 2, 4, 16, 16
    Hd, F, O = 64, 32, 8
    x = jax.random.normal(kx, (B, C, H, W), jnp.float32)
    hidden = init_rnn_state(B, Hd)
    params = init_params(kp, C=C, F=F, Hd=Hd, O=O)

    fwd = jax.jit(detectnet_forward)
    out, h_new = fwd(params, x, hidden)
    jax.block_until_ready((out, h_new))

    ref_out, ref_h = reference(params, x, hidden, scale=1.0)
    assert out.shape == ref_out.shape and h_new.shape == ref_h.shape
    # bf16 matmul operands (f32 accumulation) -> loosen tolerance vs pure f32.
    assert jnp.allclose(out, ref_out, atol=2e-2, rtol=2e-2), \
        float(jnp.max(jnp.abs(out - ref_out)))
    assert jnp.allclose(h_new, ref_h, atol=2e-2, rtol=2e-2), \
        float(jnp.max(jnp.abs(h_new - ref_h)))

    print("KERNEL_OK")
</pallas_src>

<mosaic_0001>
module attributes {stable_mosaic.version = 11 : i64} {
  func.func @_detectnet_kernel(%arg0: i32, %arg1: memref<1x256x128xbf16, #tpu.memory_space<vmem>>, %arg2: memref<1x1x128xf32, #tpu.memory_space<vmem>>, %arg3: memref<128x128xbf16, #tpu.memory_space<vmem>>, %arg4: memref<1x256xbf16, #tpu.memory_space<vmem>>, %arg5: memref<128x128xbf16, #tpu.memory_space<vmem>>, %arg6: memref<128x128xbf16, #tpu.memory_space<vmem>>, %arg7: memref<1x128xf32, #tpu.memory_space<vmem>>, %arg8: memref<128x128xbf16, #tpu.memory_space<vmem>>, %arg9: memref<1x128xf32, #tpu.memory_space<vmem>>, %arg10: memref<1x1x128xf32, #tpu.memory_space<vmem>>, %arg11: memref<1x1x128xf32, #tpu.memory_space<vmem>>) attributes {dimension_semantics = [#tpu.dimension_semantics<parallel>], iteration_bounds = array<i64: 2>, scalar_prefetch = 0 : i64, scratch_operands = 0 : i64, tpu.core_type = #tpu.core_type<tc>, window_params = [{transform_indices = @transform_0, window_bounds = array<i64: 1, 256, 128>}, {transform_indices = @transform_1, window_bounds = array<i64: 1, 1, 128>}, {pipeline_mode = #tpu.pipeline_mode<synchronous>, transform_indices = @transform_2, window_bounds = array<i64: 128, 128>}, {pipeline_mode = #tpu.pipeline_mode<synchronous>, transform_indices = @transform_3, window_bounds = array<i64: 1, 256>}, {pipeline_mode = #tpu.pipeline_mode<synchronous>, transform_indices = @transform_4, window_bounds = array<i64: 128, 128>}, {pipeline_mode = #tpu.pipeline_mode<synchronous>, transform_indices = @transform_5, window_bounds = array<i64: 128, 128>}, {pipeline_mode = #tpu.pipeline_mode<synchronous>, transform_indices = @transform_6, window_bounds = array<i64: 1, 128>}, {pipeline_mode = #tpu.pipeline_mode<synchronous>, transform_indices = @transform_7, window_bounds = array<i64: 128, 128>}, {pipeline_mode = #tpu.pipeline_mode<synchronous>, transform_indices = @transform_8, window_bounds = array<i64: 1, 128>}, {transform_indices = @transform_9, window_bounds = array<i64: 1, 1, 128>}, {transform_indices = @transform_10, window_bounds = array<i64: 1, 1, 128>}]} {
    %cst = arith.constant 0.000000e+00 : f32
    %0 = vector.broadcast %cst : f32 to vector<1x128xf32>
    %c0 = arith.constant 0 : index
    %c0_0 = arith.constant 0 : index
    %c0_1 = arith.constant 0 : index
    %1 = vector.load %arg1[%c0, %c0_0, %c0_1] : memref<1x256x128xbf16, #tpu.memory_space<vmem>>, vector<1x256x128xbf16>
    %2 = vector.shape_cast %1 : vector<1x256x128xbf16> to vector<256x128xbf16>
    %c0_2 = arith.constant 0 : index
    %c0_3 = arith.constant 0 : index
    %3 = vector.load %arg3[%c0_2, %c0_3] : memref<128x128xbf16, #tpu.memory_space<vmem>>, vector<128x128xbf16>
    %cst_4 = arith.constant dense<0.000000e+00> : vector<256x128xf32>
    %4 = tpu.matmul %2, %3, %cst_4 {dimension_numbers = #tpu.dot_dimension_numbers<[1], [0], [0], [1], [0, 0, 1, 1], [], []>} : vector<256x128xbf16>, vector<128x128xbf16>, vector<256x128xf32> -> vector<256x128xf32>
    %cst_5 = arith.constant 0.000000e+00 : f32
    %5 = vector.broadcast %cst_5 : f32 to vector<256x128xf32>
    %6 = arith.maximumf %4, %5 : vector<256x128xf32>
    %7 = arith.truncf %6 : vector<256x128xf32> to vector<256x128xbf16>
    %c0_6 = arith.constant 0 : index
    %c0_7 = arith.constant 0 : index
    %8 = vector.load %arg4[%c0_6, %c0_7] : memref<1x256xbf16, #tpu.memory_space<vmem>>, vector<1x256xbf16>
    %cst_8 = arith.constant dense<0.000000e+00> : vector<1x128xf32>
    %9 = tpu.matmul %8, %7, %cst_8 {dimension_numbers = #tpu.dot_dimension_numbers<[1], [0], [0], [1], [0, 0, 1, 1], [], []>} : vector<1x256xbf16>, vector<256x128xbf16>, vector<1x128xf32> -> vector<1x128xf32>
    %10 = arith.addf %0, %9 : vector<1x128xf32>
    %11 = arith.truncf %10 : vector<1x128xf32> to vector<1x128xbf16>
    %c0_9 = arith.constant 0 : index
    %c0_10 = arith.constant 0 : index
    %12 = vector.load %arg5[%c0_9, %c0_10] : memref<128x128xbf16, #tpu.memory_space<vmem>>, vector<128x128xbf16>
    %cst_11 = arith.constant dense<0.000000e+00> : vector<1x128xf32>
    %13 = tpu.matmul %11, %12, %cst_11 {dimension_numbers = #tpu.dot_dimension_numbers<[1], [0], [0], [1], [0, 0, 1, 1], [], []>} : vector<1x128xbf16>, vector<128x128xbf16>, vector<1x128xf32> -> vector<1x128xf32>
    %c0_12 = arith.constant 0 : index
    %c0_13 = arith.constant 0 : index
    %c0_14 = arith.constant 0 : index
    %14 = vector.load %arg2[%c0_12, %c0_13, %c0_14] : memref<1x1x128xf32, #tpu.memory_space<vmem>>, vector<1x1x128xf32>
    %15 = vector.shape_cast %14 : vector<1x1x128xf32> to vector<1x128xf32>
    %16 = arith.truncf %15 : vector<1x128xf32> to vector<1x128xbf16>
    %c0_15 = arith.constant 0 : index
    %c0_16 = arith.constant 0 : index
    %17 = vector.load %arg6[%c0_15, %c0_16] : memref<128x128xbf16, #tpu.memory_space<vmem>>, vector<128x128xbf16>
    %cst_17 = arith.constant dense<0.000000e+00> : vector<1x128xf32>
    %18 = tpu.matmul %16, %17, %cst_17 {dimension_numbers = #tpu.dot_dimension_numbers<[1], [0], [0], [1], [0, 0, 1, 1], [], []>} : vector<1x128xbf16>, vector<128x128xbf16>, vector<1x128xf32> -> vector<1x128xf32>
    %19 = arith.addf %13, %18 : vector<1x128xf32>
    %c0_18 = arith.constant 0 : index
    %c0_19 = arith.constant 0 : index
    %20 = vector.load %arg7[%c0_18, %c0_19] : memref<1x128xf32, #tpu.memory_space<vmem>>, vector<1x128xf32>
    %21 = arith.addf %19, %20 : vector<1x128xf32>
    %22 = math.tanh %21 : vector<1x128xf32>
    %c0_20 = arith.constant 0 : index
    %c0_21 = arith.constant 0 : index
    %c0_22 = arith.constant 0 : index
    %23 = vector.load %arg11[%c0_20, %c0_21, %c0_22] : memref<1x1x128xf32, #tpu.memory_space<vmem>>, vector<1x1x128xf32>
    %24 = vector.shape_cast %23 : vector<1x1x128xf32> to vector<1x128xf32>
    %25 = vector.shape_cast %22 : vector<1x128xf32> to vector<1x1x128xf32>
    tpu.vector_store %arg11[%c0_20, %c0_21, %c0_22], %25 {strides = array<i32>} : memref<1x1x128xf32, #tpu.memory_space<vmem>>, vector<1x1x128xf32>,
    %26 = arith.truncf %22 : vector<1x128xf32> to vector<1x128xbf16>
    %c0_23 = arith.constant 0 : index
    %c0_24 = arith.constant 0 : index
    %27 = vector.load %arg8[%c0_23, %c0_24] : memref<128x128xbf16, #tpu.memory_space<vmem>>, vector<128x128xbf16>
    %cst_25 = arith.constant dense<0.000000e+00> : vector<1x128xf32>
    %28 = tpu.matmul %26, %27, %cst_25 {dimension_numbers = #tpu.dot_dimension_numbers<[1], [0], [0], [1], [0, 0, 1, 1], [], []>} : vector<1x128xbf16>, vector<128x128xbf16>, vector<1x128xf32> -> vector<1x128xf32>
    %c0_26 = arith.constant 0 : index
    %c0_27 = arith.constant 0 : index
    %29 = vector.load %arg9[%c0_26, %c0_27] : memref<1x128xf32, #tpu.memory_space<vmem>>, vector<1x128xf32>
    %30 = arith.addf %28, %29 : vector<1x128xf32>
    %c0_28 = arith.constant 0 : index
    %c0_29 = arith.constant 0 : index
    %c0_30 = arith.constant 0 : index
    %31 = vector.load %arg10[%c0_28, %c0_29, %c0_30] : memref<1x1x128xf32, #tpu.memory_space<vmem>>, vector<1x1x128xf32>
    %32 = vector.shape_cast %31 : vector<1x1x128xf32> to vector<1x128xf32>
    %33 = vector.shape_cast %30 : vector<1x128xf32> to vector<1x1x128xf32>
    tpu.vector_store %arg10[%c0_28, %c0_29, %c0_30], %33 {strides = array<i32>} : memref<1x1x128xf32, #tpu.memory_space<vmem>>, vector<1x1x128xf32>,
    return
  }
  func.func @transform_0(%arg0: i32) -> (i32, i32, i32) {
    %c0_i32 = arith.constant 0 : i32
    %c0_i32_0 = arith.constant 0 : i32
    %c0_i32_1 = arith.constant 0 : i32
    return %arg0, %c0_i32, %c0_i32_0 : i32, i32, i32
  }
  func.func @transform_1(%arg0: i32) -> (i32, i32, i32) {
    %c0_i32 = arith.constant 0 : i32
    %c0_i32_0 = arith.constant 0 : i32
    %c0_i32_1 = arith.constant 0 : i32
    return %arg0, %c0_i32, %c0_i32_0 : i32, i32, i32
  }
  func.func @transform_2(%arg0: i32) -> (i32, i32) {
    %c0_i32 = arith.constant 0 : i32
    %c0_i32_0 = arith.constant 0 : i32
    %c0_i32_1 = arith.constant 0 : i32
    return %c0_i32, %c0_i32_0 : i32, i32
  }
  func.func @transform_3(%arg0: i32) -> (i32, i32) {
    %c0_i32 = arith.constant 0 : i32
    %c0_i32_0 = arith.constant 0 : i32
    %c0_i32_1 = arith.constant 0 : i32
    return %c0_i32, %c0_i32_0 : i32, i32
  }
  func.func @transform_4(%arg0: i32) -> (i32, i32) {
    %c0_i32 = arith.constant 0 : i32
    %c0_i32_0 = arith.constant 0 : i32
    %c0_i32_1 = arith.constant 0 : i32
    return %c0_i32, %c0_i32_0 : i32, i32
  }
  func.func @transform_5(%arg0: i32) -> (i32, i32) {
    %c0_i32 = arith.constant 0 : i32
    %c0_i32_0 = arith.constant 0 : i32
    %c0_i32_1 = arith.constant 0 : i32
    return %c0_i32, %c0_i32_0 : i32, i32
  }
  func.func @transform_6(%arg0: i32) -> (i32, i32) {
    %c0_i32 = arith.constant 0 : i32
    %c0_i32_0 = arith.constant 0 : i32
    %c0_i32_1 = arith.constant 0 : i32
    return %c0_i32, %c0_i32_0 : i32, i32
  }
  func.func @transform_7(%arg0: i32) -> (i32, i32) {
    %c0_i32 = arith.constant 0 : i32
    %c0_i32_0 = arith.constant 0 : i32
    %c0_i32_1 = arith.constant 0 : i32
    return %c0_i32, %c0_i32_0 : i32, i32
  }
  func.func @transform_8(%arg0: i32) -> (i32, i32) {
    %c0_i32 = arith.constant 0 : i32
    %c0_i32_0 = arith.constant 0 : i32
    %c0_i32_1 = arith.constant 0 : i32
    return %c0_i32, %c0_i32_0 : i32, i32
  }
  func.func @transform_9(%arg0: i32) -> (i32, i32, i32) {
    %c0_i32 = arith.constant 0 : i32
    %c0_i32_0 = arith.constant 0 : i32
    %c0_i32_1 = arith.constant 0 : i32
    return %arg0, %c0_i32, %c0_i32_0 : i32, i32, i32
  }
  func.func @transform_10(%arg0: i32) -> (i32, i32, i32) {
    %c0_i32 = arith.constant 0 : i32
    %c0_i32_0 = arith.constant 0 : i32
    %c0_i32_1 = arith.constant 0 : i32
    return %arg0, %c0_i32, %c0_i32_0 : i32, i32, i32
  }
}

</mosaic_0001>

<llo_original>
// kernel: detectnet_forward.1
$region0: #{detectnet_forward.1}
  #allocation0 [shape = 'u32[]', space=smem, size = 0x4, offset = 0x4, fixed_abs, tag = 'smem constant byte address 0x4 - core index']
  #allocation1 [shape = 'u32[144,128]{1,0:T(1,128)}', space=vmem, size = 0x12000, scoped, tag = 'internal scratch']
  %s0 = inlined_call_operand.vmem [shape: bf16[2,256,128], index: 0, kind: input, shape index: {}]
  %s1 = inlined_call_operand.vmem [shape: f32[2,1,128], index: 1, kind: input, shape index: {}]
  %s2 = inlined_call_operand.vmem [shape: bf16[128,128], index: 2, kind: input, shape index: {}]
  %s3 = inlined_call_operand.vmem [shape: bf16[1,256], index: 3, kind: input, shape index: {}]
  %s4 = inlined_call_operand.vmem [shape: bf16[128,128], index: 4, kind: input, shape index: {}]
  %s5 = inlined_call_operand.vmem [shape: bf16[128,128], index: 5, kind: input, shape index: {}]
  %s6 = inlined_call_operand.vmem [shape: f32[1,128], index: 6, kind: input, shape index: {}]
  %s7 = inlined_call_operand.vmem [shape: bf16[128,128], index: 7, kind: input, shape index: {}]
  %s8 = inlined_call_operand.vmem [shape: f32[1,128], index: 8, kind: input, shape index: {}]
  %s9 = inlined_call_operand.hbm [shape: f32[2,1,128], index: 9, kind: output, shape index: {0}]
  %s10 = inlined_call_operand.hbm [shape: f32[2,1,128], index: 10, kind: output, shape index: {1}]
  %11 = xla_tuple %s9, %s10
  %s12 = sld [smem:[#allocation0]]
  $region77: #{detectnet_forward.1} parent=0
    _
  %s14 = ssub.s32 1, %s12
  %s15 = scalar_select 0, %s14, %s12
  $region1: #{detectnet_forward.1} parent=0
    #allocation2 [shape = 'u8[1024]{0}', space=vmem, size = 0x400, scoped, tag = 'output window, operand 0']
    #allocation3 [shape = 's32[2]{0}', space=sflag, size = 0x8, scoped, tag = 'scoped memory for detectnet_forward.1']
    #allocation4 [shape = 'u8[1024]{0}', space=vmem, size = 0x400, scoped, tag = 'output window, operand 1']
    #allocation5 [shape = 's32[2]{0}', space=sflag, size = 0x8, scoped, tag = 'scoped memory for detectnet_forward.1']
    %16 = vsyncpa [#allocation3], 0
    %s17 = scalar_lea.sflag [#allocation3], 1
    %18 = vsyncpa %s17, 0
    %19 = vsyncpa [#allocation5], 0
    %s20 = scalar_lea.sflag [#allocation5], 1
    %21 = vsyncpa %s20, 0
    loop: start=0, step=1, limit=4
    $region2: #{detectnet_forward.1} parent=1 // loop_pre_header
      _
    $region3: #{detectnet_forward.1} parent=1 // loop_header
      %s23 = sphi 0, %s27
      %p24 = scmp.ge.s32.totalorder %s23, 4
      %s33 = sphi 0, %s35
      %s36 = sphi 0, %s33
      %s37 = sphi 0, %s36
      %s53 = sphi 0, %s37
      %s59 = sphi 0, %s61
      %s62 = sphi 0, %s59
      %s63 = sphi 0, %s62
      %s79 = sphi 0, %s63
      %s83 = sphi 0, %s83
      %s85 = sphi 0, %s83
      %s86 = sphi 0, %s85
      %s100 = sphi 0, %s86
      %s104 = sphi 0, %s104
      %s106 = sphi 0, %s104
      %s107 = sphi 0, %s106
      %s121 = sphi 0, %s107
      %s125 = sphi 0, %s125
      %s127 = sphi 0, %s125
      %s128 = sphi 0, %s127
      %s142 = sphi 0, %s128
      %s146 = sphi 0, %s146
      %s148 = sphi 0, %s146
      %s149 = sphi 0, %s148
      %s163 = sphi 0, %s149
      %s167 = sphi 0, %s167
      %s169 = sphi 0, %s167
      %s170 = sphi 0, %s169
      %s184 = sphi 0, %s170
      %s188 = sphi 0, %s188
      %s190 = sphi 0, %s188
      %s191 = sphi 0, %s190
      %s205 = sphi 0, %s191
      %s209 = sphi 0, %s209
      %s211 = sphi 0, %s209
      %s212 = sphi 0, %s211
      %s226 = sphi 0, %s212
      %s232 = sphi 0, %s234
      %s235 = sphi 0, %s232
      %s236 = sphi 0, %s235
      %s252 = sphi 0, %s236
      %s258 = sphi 0, %s260
      %s261 = sphi 0, %s258
      %s262 = sphi 0, %s261
      %s278 = sphi 0, %s262
    $region4: #{detectnet_forward.1} parent=1 // loop_header_branch
      %26 = sbr.rel (%p24) target = $region8
    $region5: #{detectnet_forward.1} parent=1 // loop_body
      %s28 = ssub.s32 %s23, 1
      %s29 = ssub.s32 %s23, 2
      %s30 = sadd.s32 %s23, 1
      %s31 = ssub.s32 %s23, %s30
      %p32 = scmp.eq.s32.totalorder %s31, 0
      %s34 = sadd.s32 %s33, 1
      %s35 = scalar_select %p32, %s33, %s34
      %p38 = pneg %p32
      %p39 = scmp.eq.s32.totalorder %s23, 1
      %p40 = por %p38, %p39
      %p41 = scmp.ne.s32.totalorder %s33, %s36
      %p42 = scmp.eq.s32.totalorder %s23, 0
      %p43 = por %p41, %p42
      %p44 = scmp.ne.s32.totalorder %s33, %s36
      %p45 = scmp.eq.s32.totalorder %s28, 1
      %p46 = por %p44, %p45
      %p47 = scmp.ne.s32.totalorder %s36, %s37
      %p48 = scmp.eq.s32.totalorder %s28, 0
      %p49 = por %p47, %p48
      %p50 = scmp.ne.s32.totalorder %s36, %s37
      %p51 = scmp.eq.s32.totalorder %s29, 1
      %p52 = por %p50, %p51
      %p54 = scmp.ne.s32.totalorder %s37, %s53
      %p55 = scmp.eq.s32.totalorder %s29, 0
      %p56 = por %p54, %p55
      %s57 = ssub.s32 %s23, %s30
      %p58 = scmp.eq.s32.totalorder %s57, 0
      %s60 = sadd.s32 %s59, 1
      %s61 = scalar_select %p58, %s59, %s60
      %p64 = pneg %p58
      %p65 = scmp.eq.s32.totalorder %s23, 1
      %p66 = por %p64, %p65
      %p67 = scmp.ne.s32.totalorder %s59, %s62
      %p68 = scmp.eq.s32.totalorder %s23, 0
      %p69 = por %p67, %p68
      %p70 = scmp.ne.s32.totalorder %s59, %s62
      %p71 = scmp.eq.s32.totalorder %s28, 1
      %p72 = por %p70, %p71
      %p73 = scmp.ne.s32.totalorder %s62, %s63
      %p74 = scmp.eq.s32.totalorder %s28, 0
      %p75 = por %p73, %p74
      %p76 = scmp.ne.s32.totalorder %s62, %s63
      %p77 = scmp.eq.s32.totalorder %s29, 1
      %p78 = por %p76, %p77
      %p80 = scmp.ne.s32.totalorder %s63, %s79
      %p81 = scmp.eq.s32.totalorder %s29, 0
      %p82 = por %p80, %p81
      %s84 = sadd.s32 %s83, 1
      %p87 = scmp.eq.s32.totalorder %s23, 1
      %p88 = scmp.ne.s32.totalorder %s83, %s85
      %p89 = scmp.eq.s32.totalorder %s23, 0
      %p90 = por %p88, %p89
      %p91 = scmp.ne.s32.totalorder %s83, %s85
      %p92 = scmp.eq.s32.totalorder %s28, 1
      %p93 = por %p91, %p92
      %p94 = scmp.ne.s32.totalorder %s85, %s86
      %p95 = scmp.eq.s32.totalorder %s28, 0
      %p96 = por %p94, %p95
      %p97 = scmp.ne.s32.totalorder %s85, %s86
      %p98 = scmp.eq.s32.totalorder %s29, 1
      %p99 = por %p97, %p98
      %p101 = scmp.ne.s32.totalorder %s86, %s100
      %p102 = scmp.eq.s32.totalorder %s29, 0
      %p103 = por %p101, %p102
      %s105 = sadd.s32 %s104, 1
      %p108 = scmp.eq.s32.totalorder %s23, 1
      %p109 = scmp.ne.s32.totalorder %s104, %s106
      %p110 = scmp.eq.s32.totalorder %s23, 0
      %p111 = por %p109, %p110
      %p112 = scmp.ne.s32.totalorder %s104, %s106
      %p113 = scmp.eq.s32.totalorder %s28, 1
      %p114 = por %p112, %p113
      %p115 = scmp.ne.s32.totalorder %s106, %s107
      %p116 = scmp.eq.s32.totalorder %s28, 0
      %p117 = por %p115, %p116
      %p118 = scmp.ne.s32.totalorder %s106, %s107
      %p119 = scmp.eq.s32.totalorder %s29, 1
      %p120 = por %p118, %p119
      %p122 = scmp.ne.s32.totalorder %s107, %s121
      %p123 = scmp.eq.s32.totalorder %s29, 0
      %p124 = por %p122, %p123
      %s126 = sadd.s32 %s125, 1
      %p129 = scmp.eq.s32.totalorder %s23, 1
      %p130 = scmp.ne.s32.totalorder %s125, %s127
      %p131 = scmp.eq.s32.totalorder %s23, 0
      %p132 = por %p130, %p131
      %p133 = scmp.ne.s32.totalorder %s125, %s127
      %p134 = scmp.eq.s32.totalorder %s28, 1
      %p135 = por %p133, %p134
      %p136 = scmp.ne.s32.totalorder %s127, %s128
      %p137 = scmp.eq.s32.totalorder %s28, 0
      %p138 = por %p136, %p137
      %p139 = scmp.ne.s32.totalorder %s127, %s128
      %p140 = scmp.eq.s32.totalorder %s29, 1
      %p141 = por %p139, %p140
      %p143 = scmp.ne.s32.totalorder %s128, %s142
      %p144 = scmp.eq.s32.totalorder %s29, 0
      %p145 = por %p143, %p144
      %s147 = sadd.s32 %s146, 1
      %p150 = scmp.eq.s32.totalorder %s23, 1
      %p151 = scmp.ne.s32.totalorder %s146, %s148
      %p152 = scmp.eq.s32.totalorder %s23, 0
      %p153 = por %p151, %p152
      %p154 = scmp.ne.s32.totalorder %s146, %s148
      %p155 = scmp.eq.s32.totalorder %s28, 1
      %p156 = por %p154, %p155
      %p157 = scmp.ne.s32.totalorder %s148, %s149
      %p158 = scmp.eq.s32.totalorder %s28, 0
      %p159 = por %p157, %p158
      %p160 = scmp.ne.s32.totalorder %s148, %s149
      %p161 = scmp.eq.s32.totalorder %s29, 1
      %p162 = por %p160, %p161
      %p164 = scmp.ne.s32.totalorder %s149, %s163
      %p165 = scmp.eq.s32.totalorder %s29, 0
      %p166 = por %p164, %p165
      %s168 = sadd.s32 %s167, 1
      %p171 = scmp.eq.s32.totalorder %s23, 1
      %p172 = scmp.ne.s32.totalorder %s167, %s169
      %p173 = scmp.eq.s32.totalorder %s23, 0
      %p174 = por %p172, %p173
      %p175 = scmp.ne.s32.totalorder %s167, %s169
      %p176 = scmp.eq.s32.totalorder %s28, 1
      %p177 = por %p175, %p176
      %p178 = scmp.ne.s32.totalorder %s169, %s170
      %p179 = scmp.eq.s32.totalorder %s28, 0
      %p180 = por %p178, %p179
      %p181 = scmp.ne.s32.totalorder %s169, %s170
      %p182 = scmp.eq.s32.totalorder %s29, 1
      %p183 = por %p181, %p182
      %p185 = scmp.ne.s32.totalorder %s170, %s184
      %p186 = scmp.eq.s32.totalorder %s29, 0
      %p187 = por %p185, %p186
      %s189 = sadd.s32 %s188, 1
      %p192 = scmp.eq.s32.totalorder %s23, 1
      %p193 = scmp.ne.s32.totalorder %s188, %s190
      %p194 = scmp.eq.s32.totalorder %s23, 0
      %p195 = por %p193, %p194
      %p196 = scmp.ne.s32.totalorder %s188, %s190
      %p197 = scmp.eq.s32.totalorder %s28, 1
      %p198 = por %p196, %p197
      %p199 = scmp.ne.s32.totalorder %s190, %s191
      %p200 = scmp.eq.s32.totalorder %s28, 0
      %p201 = por %p199, %p200
      %p202 = scmp.ne.s32.totalorder %s190, %s191
      %p203 = scmp.eq.s32.totalorder %s29, 1
      %p204 = por %p202, %p203
      %p206 = scmp.ne.s32.totalorder %s191, %s205
      %p207 = scmp.eq.s32.totalorder %s29, 0
      %p208 = por %p206, %p207
      %s210 = sadd.s32 %s209, 1
      %p213 = scmp.eq.s32.totalorder %s23, 1
      %p214 = scmp.ne.s32.totalorder %s209, %s211
      %p215 = scmp.eq.s32.totalorder %s23, 0
      %p216 = por %p214, %p215
      %p217 = scmp.ne.s32.totalorder %s209, %s211
      %p218 = scmp.eq.s32.totalorder %s28, 1
      %p219 = por %p217, %p218
      %p220 = scmp.ne.s32.totalorder %s211, %s212
      %p221 = scmp.eq.s32.totalorder %s28, 0
      %p222 = por %p220, %p221
      %p223 = scmp.ne.s32.totalorder %s211, %s212
      %p224 = scmp.eq.s32.totalorder %s29, 1
      %p225 = por %p223, %p224
      %p227 = scmp.ne.s32.totalorder %s212, %s226
      %p228 = scmp.eq.s32.totalorder %s29, 0
      %p229 = por %p227, %p228
      %s230 = ssub.s32 %s23, %s30
      %p231 = scmp.eq.s32.totalorder %s230, 0
      %s233 = sadd.s32 %s232, 1
      %s234 = scalar_select %p231, %s232, %s233
      %p237 = pneg %p231
      %p238 = scmp.eq.s32.totalorder %s23, 1
      %p239 = por %p237, %p238
      %p240 = scmp.ne.s32.totalorder %s232, %s235
      %p241 = scmp.eq.s32.totalorder %s23, 0
      %p242 = por %p240, %p241
      %p243 = scmp.ne.s32.totalorder %s232, %s235
      %p244 = scmp.eq.s32.totalorder %s28, 1
      %p245 = por %p243, %p244
      %p246 = scmp.ne.s32.totalorder %s235, %s236
      %p247 = scmp.eq.s32.totalorder %s28, 0
      %p248 = por %p246, %p247
      %p249 = scmp.ne.s32.totalorder %s235, %s236
      %p250 = scmp.eq.s32.totalorder %s29, 1
      %p251 = por %p249, %p250
      %p253 = scmp.ne.s32.totalorder %s236, %s252
      %p254 = scmp.eq.s32.totalorder %s29, 0
      %p255 = por %p253, %p254
      %s256 = ssub.s32 %s23, %s30
      %p257 = scmp.eq.s32.totalorder %s256, 0
      %s259 = sadd.s32 %s258, 1
      %s260 = scalar_select %p257, %s258, %s259
      %p263 = pneg %p257
      %p264 = scmp.eq.s32.totalorder %s23, 1
      %p265 = por %p263, %p264
      %p266 = scmp.ne.s32.totalorder %s258, %s261
      %p267 = scmp.eq.s32.totalorder %s23, 0
      %p268 = por %p266, %p267
      %p269 = scmp.ne.s32.totalorder %s258, %s261
      %p270 = scmp.eq.s32.totalorder %s28, 1
      %p271 = por %p269, %p270
      %p272 = scmp.ne.s32.totalorder %s261, %s262
      %p273 = scmp.eq.s32.totalorder %s28, 0
      %p274 = por %p272, %p273
      %p275 = scmp.ne.s32.totalorder %s261, %s262
      %p276 = scmp.eq.s32.totalorder %s29, 1
      %p277 = por %p275, %p276
      %p279 = scmp.ne.s32.totalorder %s262, %s278
      %p280 = scmp.eq.s32.totalorder %s29, 0
      %p281 = por %p279, %p280
      %p282 = scmp.le.s32.totalorder 1, %s23
      %p283 = scmp.lt.s32.totalorder %s23, 3
      %p284 = pnand %p282, %p283
      %p285 = pneg %p284
      // Predicated region
      $region9: #{detectnet_forward.1} parent=5 // pred_check
        _
      $region10: #{detectnet_forward.1} parent=5 // pred_check_branch
        %287 = sbr.rel (%p284) target = $region12
      $region11: #{detectnet_forward.1} parent=5 // pred_region
        %s288 = ssub.s32 %s23, 1
        // Predicated region
        $region13: #{detectnet_forward.1} parent=11 // pred_check
          %p289 = pneg %p96
        $region14: #{detectnet_forward.1} parent=11 // pred_check_branch
          %291 = sbr.rel (%p289) target = $region16
        $region15: #{detectnet_forward.1} parent=11 // pred_region
          _
        $region16: #{detectnet_forward.1} parent=11 // pred_fallthru
          _
        // Predicated region
        $region17: #{detectnet_forward.1} parent=11 // pred_check
          %p292 = pneg %p117
        $region18: #{detectnet_forward.1} parent=11 // pred_check_branch
          %294 = sbr.rel (%p292) target = $region20
        $region19: #{detectnet_forward.1} parent=11 // pred_region
          _
        $region20: #{detectnet_forward.1} parent=11 // pred_fallthru
          _
        // Predicated region
        $region21: #{detectnet_forward.1} parent=11 // pred_check
          %p295 = pneg %p138
        $region22: #{detectnet_forward.1} parent=11 // pred_check_branch
          %297 = sbr.rel (%p295) target = $region24
        $region23: #{detectnet_forward.1} parent=11 // pred_region
          _
        $region24: #{detectnet_forward.1} parent=11 // pred_fallthru
          _
        // Predicated region
        $region25: #{detectnet_forward.1} parent=11 // pred_check
          %p298 = pneg %p159
        $region26: #{detectnet_forward.1} parent=11 // pred_check_branch
          %300 = sbr.rel (%p298) target = $region28
        $region27: #{detectnet_forward.1} parent=11 // pred_region
          _
        $region28: #{detectnet_forward.1} parent=11 // pred_fallthru
          _
        // Predicated region
        $region29: #{detectnet_forward.1} parent=11 // pred_check
          %p301 = pneg %p180
        $region30: #{detectnet_forward.1} parent=11 // pred_check_branch
          %303 = sbr.rel (%p301) target = $region32
        $region31: #{detectnet_forward.1} parent=11 // pred_region
          _
        $region32: #{detectnet_forward.1} parent=11 // pred_fallthru
          _
        // Predicated region
        $region33: #{detectnet_forward.1} parent=11 // pred_check
          %p304 = pneg %p201
        $region34: #{detectnet_forward.1} parent=11 // pred_check_branch
          %306 = sbr.rel (%p304) target = $region36
        $region35: #{detectnet_forward.1} parent=11 // pred_region
          _
        $region36: #{detectnet_forward.1} parent=11 // pred_fallthru
          _
        // Predicated region
        $region37: #{detectnet_forward.1} parent=11 // pred_check
          %p307 = pneg %p222
        $region38: #{detectnet_forward.1} parent=11 // pred_check_branch
          %309 = sbr.rel (%p307) target = $region40
        $region39: #{detectnet_forward.1} parent=11 // pred_region
          _
        $region40: #{detectnet_forward.1} parent=11 // pred_fallthru
          _
      $region12: #{detectnet_forward.1} parent=5 // pred_fallthru
        _
      %p310 = scmp.lt.s32.totalorder %s23, 2
      // Predicated region
      $region41: #{detectnet_forward.1} parent=5 // pred_check
        %p311 = pneg %p310
      $region42: #{detectnet_forward.1} parent=5 // pred_check_branch
        %313 = sbr.rel (%p311) target = $region44
      $region43: #{detectnet_forward.1} parent=5 // pred_region
        // Predicated region
        $region45: #{detectnet_forward.1} parent=43 // pred_check
          %p314 = pneg %p43
        $region46: #{detectnet_forward.1} parent=43 // pred_check_branch
          %316 = sbr.rel (%p314) target = $region48
        $region47: #{detectnet_forward.1} parent=43 // pred_region
          %p317 = scmp.lt.s32.totalorder %s23, 1
          %s318 = scalar_select %p317, %s23, 1
          %s319 = smul.addr %s318, 32
          %s320 = smul.addr %s319, 4
          %s321 = scalar_lea.vmem %s0, %s320
        $region48: #{detectnet_forward.1} parent=43 // pred_fallthru
          _
        // Predicated region
        $region49: #{detectnet_forward.1} parent=43 // pred_check
          %p322 = pneg %p69
        $region50: #{detectnet_forward.1} parent=43 // pred_check_branch
          %324 = sbr.rel (%p322) target = $region52
        $region51: #{detectnet_forward.1} parent=43 // pred_region
          %p325 = scmp.lt.s32.totalorder %s23, 1
          %s326 = scalar_select %p325, %s23, 1
          %s327 = scalar_lea.vmem %s1, %s326
        $region52: #{detectnet_forward.1} parent=43 // pred_fallthru
          _
      $region44: #{detectnet_forward.1} parent=5 // pred_fallthru
        _
      %p328 = scmp.le.s32.totalorder 1, %s23
      %p329 = scmp.lt.s32.totalorder %s23, 3
      %p330 = pnand %p328, %p329
      %p331 = pneg %p330
      // Predicated region
      $region53: #{detectnet_forward.1} parent=5 // pred_check
        _
      $region54: #{detectnet_forward.1} parent=5 // pred_check_branch
        %333 = sbr.rel (%p330) target = $region56
      $region55: #{detectnet_forward.1} parent=5 // pred_region
        %s334 = ssub.s32 %s23, 1
        %p335 = scmp.lt.s32.totalorder %s28, 1
        %s336 = scalar_select %p335, %s28, 1
        %s337 = smul.addr %s336, 32
        %s338 = smul.addr %s337, 4
        %s339 = scalar_lea.vmem %s0, %s338
        %p340 = pneg %p49
        %p341 = pneg %p46
        %p342 = scmp.lt.s32.totalorder %s28, 1
        %s343 = scalar_select %p342, %s28, 1
        %s344 = scalar_lea.vmem %s1, %s343
        %p345 = pneg %p75
        %p346 = pneg %p72
        %p347 = pneg %p96
        %p348 = pneg %p93
        %p349 = pneg %p117
        %p350 = pneg %p114
        %p351 = pneg %p138
        %p352 = pneg %p135
        %p353 = pneg %p159
        %p354 = pneg %p156
        %p355 = pneg %p180
        %p356 = pneg %p177
        %p357 = pneg %p201
        %p358 = pneg %p198
        %p359 = pneg %p222
        %p360 = pneg %p219
        %p361 = pneg %p248
        %p362 = pneg %p245
        %s363 = sand.u32 %s235, 1
        %s364 = scalar_lea.sflag [#allocation3], %s363
        %s365 = sand.u32 %s235, 1
        %s366 = scalar_lea.vmem [#allocation2], %s365
        %p367 = pneg %p274
        %p368 = pneg %p271
        %s369 = sand.u32 %s261, 1
        %s370 = scalar_lea.sflag [#allocation5], %s369
        %s371 = sand.u32 %s261, 1
        %s372 = scalar_lea.vmem [#allocation4], %s371
        %p373 = scmp.lt.s32.totalorder %s28, 1
        %s374 = scalar_select %p373, %s28, 1
        %s375 = smul.addr %s374, 32
        %s376 = smul.addr %s375, 4
        %s377 = scalar_lea.vmem %s0, %s376
        %p378 = scmp.lt.s32.totalorder %s28, 1
        %s379 = scalar_select %p378, %s28, 1
        %s380 = scalar_lea.vmem %s1, %s379
        %v382 = vld [vmem:[%s377] sm:$0xf]
        %v383 = vld [vmem:[%s377 + $0x4] sm:$0xf]
        %v384 = vld [vmem:[%s377 + $0x8] sm:$0xf]
        %v385 = vld [vmem:[%s377 + $0xc] sm:$0xf]
        %v386 = vld [vmem:[%s377 + $0x10] sm:$0xf]
        %v387 = vld [vmem:[%s377 + $0x14] sm:$0xf]
        %v388 = vld [vmem:[%s377 + $0x18] sm:$0xf]
        %v389 = vld [vmem:[%s377 + $0x1c] sm:$0xf]
        %v390 = vld [vmem:[%s377 + $0x20] sm:$0xf]
        %v391 = vld [vmem:[%s377 + $0x24] sm:$0xf]
        %v392 = vld [vmem:[%s377 + $0x28] sm:$0xf]
        %v393 = vld [vmem:[%s377 + $0x2c] sm:$0xf]
        %v394 = vld [vmem:[%s377 + $0x30] sm:$0xf]
        %v395 = vld [vmem:[%s377 + $0x34] sm:$0xf]
        %v396 = vld [vmem:[%s377 + $0x38] sm:$0xf]
        %v397 = vld [vmem:[%s377 + $0x3c] sm:$0xf]
        %v398 = vld [vmem:[%s377 + $0x40] sm:$0xf]
        %v399 = vld [vmem:[%s377 + $0x44] sm:$0xf]
        %v400 = vld [vmem:[%s377 + $0x48] sm:$0xf]
        %v401 = vld [vmem:[%s377 + $0x4c] sm:$0xf]
        %v402 = vld [vmem:[%s377 + $0x50] sm:$0xf]
        %v403 = vld [vmem:[%s377 + $0x54] sm:$0xf]
        %v404 = vld [vmem:[%s377 + $0x58] sm:$0xf]
        %v405 = vld [vmem:[%s377 + $0x5c] sm:$0xf]
        %v406 = vld [vmem:[%s377 + $0x60] sm:$0xf]
        %v407 = vld [vmem:[%s377 + $0x64] sm:$0xf]
        %v408 = vld [vmem:[%s377 + $0x68] sm:$0xf]
        %v409 = vld [vmem:[%s377 + $0x6c] sm:$0xf]
        %v410 = vld [vmem:[%s377 + $0x70] sm:$0xf]
        %v411 = vld [vmem:[%s377 + $0x74] sm:$0xf]
        %v412 = vld [vmem:[%s377 + $0x78] sm:$0xf]
        %v413 = vld [vmem:[%s377 + $0x7c] sm:$0xf]
        %v414 = vld [vmem:[%s2] sm:$0xf]
        %v415 = vld [vmem:[%s2 + $0x4] sm:$0xf]
        %v416 = vld [vmem:[%s2 + $0x8] sm:$0xf]
        %v417 = vld [vmem:[%s2 + $0xc] sm:$0xf]
        %v418 = vld [vmem:[%s2 + $0x10] sm:$0xf]
        %v419 = vld [vmem:[%s2 + $0x14] sm:$0xf]
        %v420 = vld [vmem:[%s2 + $0x18] sm:$0xf]
        %v421 = vld [vmem:[%s2 + $0x1c] sm:$0xf]
        %v422 = vld [vmem:[%s2 + $0x20] sm:$0xf]
        %v423 = vld [vmem:[%s2 + $0x24] sm:$0xf]
        %v424 = vld [vmem:[%s2 + $0x28] sm:$0xf]
        %v425 = vld [vmem:[%s2 + $0x2c] sm:$0xf]
        %v426 = vld [vmem:[%s2 + $0x30] sm:$0xf]
        %v427 = vld [vmem:[%s2 + $0x34] sm:$0xf]
        %v428 = vld [vmem:[%s2 + $0x38] sm:$0xf]
        %v429 = vld [vmem:[%s2 + $0x3c] sm:$0xf]
        %v462 = vunpack.c.l.b16 %v382
        %v463 = vunpack.c.l.b16 %v383
        %v464 = vunpack.c.l.b16 %v384
        %v465 = vunpack.c.l.b16 %v385
        %v466 = vunpack.c.l.b16 %v386
        %v467 = vunpack.c.l.b16 %v387
        %v468 = vunpack.c.l.b16 %v388
        %v469 = vunpack.c.l.b16 %v389
        %v470 = vunpack.c.l.b16 %v390
        %v471 = vunpack.c.l.b16 %v391
        %v472 = vunpack.c.l.b16 %v392
        %v473 = vunpack.c.l.b16 %v393
        %v474 = vunpack.c.l.b16 %v394
        %v475 = vunpack.c.l.b16 %v395
        %v476 = vunpack.c.l.b16 %v396
        %v477 = vunpack.c.l.b16 %v397
        %v478 = vunpack.c.l.b16 %v398
        %v479 = vunpack.c.l.b16 %v399
        %v480 = vunpack.c.l.b16 %v400
        %v481 = vunpack.c.l.b16 %v401
        %v482 = vunpack.c.l.b16 %v402
        %v483 = vunpack.c.l.b16 %v403
        %v484 = vunpack.c.l.b16 %v404
        %v485 = vunpack.c.l.b16 %v405
        %v486 = vunpack.c.l.b16 %v406
        %v487 = vunpack.c.l.b16 %v407
        %v488 = vunpack.c.l.b16 %v408
        %v489 = vunpack.c.l.b16 %v409
        %v490 = vunpack.c.l.b16 %v410
        %v491 = vunpack.c.l.b16 %v411
        %v492 = vunpack.c.l.b16 %v412
        %v493 = vunpack.c.l.b16 %v413
        %v494 = vpack.c.b16 %v463, %v462
        %v495 = vpack.c.b16 %v465, %v464
        %v496 = vpack.c.b16 %v467, %v466
        %v497 = vpack.c.b16 %v469, %v468
        %v498 = vpack.c.b16 %v471, %v470
        %v499 = vpack.c.b16 %v473, %v472
        %v500 = vpack.c.b16 %v475, %v474
        %v501 = vpack.c.b16 %v477, %v476
        %v502 = vpack.c.b16 %v479, %v478
        %v503 = vpack.c.b16 %v481, %v480
        %v504 = vpack.c.b16 %v483, %v482
        %v505 = vpack.c.b16 %v485, %v484
        %v506 = vpack.c.b16 %v487, %v486
        %v507 = vpack.c.b16 %v489, %v488
        %v508 = vpack.c.b16 %v491, %v490
        %v509 = vpack.c.b16 %v493, %v492
        %v542 = vunpack.c.l.b16 %v414
        %v543 = vunpack.c.l.b16 %v415
        %v544 = vunpack.c.l.b16 %v416
        %v545 = vunpack.c.l.b16 %v417
        %v546 = vunpack.c.l.b16 %v418
        %v547 = vunpack.c.l.b16 %v419
        %v548 = vunpack.c.l.b16 %v420
        %v549 = vunpack.c.l.b16 %v421
        %v550 = vunpack.c.l.b16 %v422
        %v551 = vunpack.c.l.b16 %v423
        %v552 = vunpack.c.l.b16 %v424
        %v553 = vunpack.c.l.b16 %v425
        %v554 = vunpack.c.l.b16 %v426
        %v555 = vunpack.c.l.b16 %v427
        %v556 = vunpack.c.l.b16 %v428
        %v557 = vunpack.c.l.b16 %v429
        %v558 = vpack.c.b16 %v543, %v542
        %v559 = vpack.c.b16 %v545, %v544
        %v560 = vpack.c.b16 %v547, %v546
        %v561 = vpack.c.b16 %v549, %v548
        %v562 = vpack.c.b16 %v551, %v550
        %v563 = vpack.c.b16 %v553, %v552
        %v564 = vpack.c.b16 %v555, %v554
        %v565 = vpack.c.b16 %v557, %v556
        %574 = vmatprep.subr.bf16.mxu0 0
        %575 = vmatpush1.bf16.msra.mxu0 %v558
        %576 = vmatprep.subr.bf16.mxu0 0
        %577 = vmatpush1.bf16.msra.mxu0 %v559
        %578 = vmatprep.subr.bf16.mxu0 0
        %579 = vmatpush1.bf16.msra.mxu0 %v560
        %580 = vmatprep.subr.bf16.mxu0 0
        %581 = vmatpush1.bf16.msra.mxu0 %v561
        %582 = vmatprep.subr.bf16.mxu0 0
        %583 = vmatpush1.bf16.msra.mxu0 %v562
        %584 = vmatprep.subr.bf16.mxu0 0
        %585 = vmatpush1.bf16.msra.mxu0 %v563
        %586 = vmatprep.subr.bf16.mxu0 0
        %587 = vmatpush1.bf16.msra.mxu0 %v564
        %588 = vmatprep.subr.bf16.mxu0 0
        %589 = vmatpush1.bf16.msra.mxu0 %v565
        %590 = vmatprep.subr.bf16.mxu0 0
        %591 = vmatpush1.bf16.msra.mxu0 0
        %592 = vmatprep.subr.bf16.mxu0 0
        %593 = vmatpush1.bf16.msra.mxu0 0
        %594 = vmatprep.subr.bf16.mxu0 0
        %595 = vmatpush1.bf16.msra.mxu0 0
        %596 = vmatprep.subr.bf16.mxu0 0
        %597 = vmatpush1.bf16.msra.mxu0 0
        %598 = vmatprep.subr.bf16.mxu0 0
        %599 = vmatpush1.bf16.msra.mxu0 0
        %600 = vmatprep.subr.bf16.mxu0 0
        %601 = vmatpush1.bf16.msra.mxu0 0
        %602 = vmatprep.subr.bf16.mxu0 0
        %603 = vmatpush1.bf16.msra.mxu0 0
        %604 = vmatprep.subr.bf16.mxu0 0
        %605 = vmatpush1.bf16.msra.mxu0 0
        %606 = vmatprep.mubr.bf16.mxu0 0
        %607 = vmatmul.mubr.bf16.gmra.mrb[0].mxu0 %v494
        %v608 = vpop.f32.mrb[0].mxu0
        %v609 = vadd.f32 0.0, %v608
        %v610 = vpop.f32.mrb[0].mxu0
        %v611 = vpop.f32.mrb[0].mxu0
        %v612 = vadd.f32 0.0, %v611
        %v613 = vpop.f32.mrb[0].mxu0
        %614 = vmatprep.mubr.bf16.mxu0 0
        %615 = vmatmul.mubr.bf16.gmra.mrb[0].mxu0 %v495
        %v616 = vpop.f32.mrb[0].mxu0
        %v617 = vadd.f32 0.0, %v616
        %v618 = vpop.f32.mrb[0].mxu0
        %v619 = vpop.f32.mrb[0].mxu0
        %v620 = vadd.f32 0.0, %v619
        %v621 = vpop.f32.mrb[0].mxu0
        %622 = vmatprep.mubr.bf16.mxu0 0
        %623 = vmatmul.mubr.bf16.gmra.mrb[0].mxu0 %v496
        %v624 = vpop.f32.mrb[0].mxu0
        %v625 = vadd.f32 0.0, %v624
        %v626 = vpop.f32.mrb[0].mxu0
        %v627 = vpop.f32.mrb[0].mxu0
        %v628 = vadd.f32 0.0, %v627
        %v629 = vpop.f32.mrb[0].mxu0
        %630 = vmatprep.mubr.bf16.mxu0 0
        %631 = vmatmul.mubr.bf16.gmra.mrb[0].mxu0 %v497
        %v632 = vpop.f32.mrb[0].mxu0
        %v633 = vadd.f32 0.0, %v632
        %v634 = vpop.f32.mrb[0].mxu0
        %v635 = vpop.f32.mrb[0].mxu0
        %v636 = vadd.f32 0.0, %v635
        %v637 = vpop.f32.mrb[0].mxu0
        %638 = vmatprep.mubr.bf16.mxu0 0
        %639 = vmatmul.mubr.bf16.gmra.mrb[0].mxu0 %v498
        %v640 = vpop.f32.mrb[0].mxu0
        %v641 = vadd.f32 0.0, %v640
        %v642 = vpop.f32.mrb[0].mxu0
        %v643 = vpop.f32.mrb[0].mxu0
        %v644 = vadd.f32 0.0, %v643
        %v645 = vpop.f32.mrb[0].mxu0
        %646 = vmatprep.mubr.bf16.mxu0 0
        %647 = vmatmul.mubr.bf16.gmra.mrb[0].mxu0 %v499
        %v648 = vpop.f32.mrb[0].mxu0
        %v649 = vadd.f32 0.0, %v648
        %v650 = vpop.f32.mrb[0].mxu0
        %v651 = vpop.f32.mrb[0].mxu0
        %v652 = vadd.f32 0.0, %v651
        %v653 = vpop.f32.mrb[0].mxu0
        %654 = vmatprep.mubr.bf16.mxu0 0
        %655 = vmatmul.mubr.bf16.gmra.mrb[0].mxu0 %v500
        %v656 = vpop.f32.mrb[0].mxu0
        %v657 = vadd.f32 0.0, %v656
        %v658 = vpop.f32.mrb[0].mxu0
        %v659 = vpop.f32.mrb[0].mxu0
        %v660 = vadd.f32 0.0, %v659
        %v661 = vpop.f32.mrb[0].mxu0
        %662 = vmatprep.mubr.bf16.mxu0 0
        %663 = vmatmul.mubr.bf16.gmra.mrb[0].mxu0 %v501
        %v664 = vpop.f32.mrb[0].mxu0
        %v665 = vadd.f32 0.0, %v664
        %v666 = vpop.f32.mrb[0].mxu0
        %v667 = vpop.f32.mrb[0].mxu0
        %v668 = vadd.f32 0.0, %v667
        %v669 = vpop.f32.mrb[0].mxu0
        %670 = vmatprep.mubr.bf16.mxu0 0
        %671 = vmatmul.mubr.bf16.gmra.mrb[0].mxu0 %v502
        %v672 = vpop.f32.mrb[0].mxu0
        %v673 = vadd.f32 0.0, %v672
        %v674 = vpop.f32.mrb[0].mxu0
        %v675 = vpop.f32.mrb[0].mxu0
        %v676 = vadd.f32 0.0, %v675
        %v677 = vpop.f32.mrb[0].mxu0
        %678 = vmatprep.mubr.bf16.mxu0 0
        %679 = vmatmul.mubr.bf16.gmra.mrb[0].mxu0 %v503
        %v680 = vpop.f32.mrb[0].mxu0
        %v681 = vadd.f32 0.0, %v680
        %v682 = vpop.f32.mrb[0].mxu0
        %v683 = vpop.f32.mrb[0].mxu0
        %v684 = vadd.f32 0.0, %v683
        %v685 = vpop.f32.mrb[0].mxu0
        %686 = vmatprep.mubr.bf16.mxu0 0
        %687 = vmatmul.mubr.bf16.gmra.mrb[0].mxu0 %v504
        %v688 = vpop.f32.mrb[0].mxu0
        %v689 = vadd.f32 0.0, %v688
        %v690 = vpop.f32.mrb[0].mxu0
        %v691 = vpop.f32.mrb[0].mxu0
        %v692 = vadd.f32 0.0, %v691
        %v693 = vpop.f32.mrb[0].mxu0
        %694 = vmatprep.mubr.bf16.mxu0 0
        %695 = vmatmul.mubr.bf16.gmra.mrb[0].mxu0 %v505
        %v696 = vpop.f32.mrb[0].mxu0
        %v697 = vadd.f32 0.0, %v696
        %v698 = vpop.f32.mrb[0].mxu0
        %v699 = vpop.f32.mrb[0].mxu0
        %v700 = vadd.f32 0.0, %v699
        %v701 = vpop.f32.mrb[0].mxu0
        %702 = vmatprep.mubr.bf16.mxu0 0
        %703 = vmatmul.mubr.bf16.gmra.mrb[0].mxu0 %v506
        %v704 = vpop.f32.mrb[0].mxu0
        %v705 = vadd.f32 0.0, %v704
        %v706 = vpop.f32.mrb[0].mxu0
        %v707 = vpop.f32.mrb[0].mxu0
        %v708 = vadd.f32 0.0, %v707
        %v709 = vpop.f32.mrb[0].mxu0
        %710 = vmatprep.mubr.bf16.mxu0 0
        %711 = vmatmul.mubr.bf16.gmra.mrb[0].mxu0 %v507
        %v712 = vpop.f32.mrb[0].mxu0
        %v713 = vadd.f32 0.0, %v712
        %v714 = vpop.f32.mrb[0].mxu0
        %v715 = vpop.f32.mrb[0].mxu0
        %v716 = vadd.f32 0.0, %v715
        %v717 = vpop.f32.mrb[0].mxu0
        %718 = vmatprep.mubr.bf16.mxu0 0
        %719 = vmatmul.mubr.bf16.gmra.mrb[0].mxu0 %v508
        %v720 = vpop.f32.mrb[0].mxu0
        %v721 = vadd.f32 0.0, %v720
        %v722 = vpop.f32.mrb[0].mxu0
        %v723 = vpop.f32.mrb[0].mxu0
        %v724 = vadd.f32 0.0, %v723
        %v725 = vpop.f32.mrb[0].mxu0
        %726 = vmatprep.mubr.bf16.mxu0 0
        %727 = vmatmul.mubr.bf16.gmra.mrb[0].mxu0 %v509
        %v728 = vpop.f32.mrb[0].mxu0
        %v729 = vadd.f32 0.0, %v728
        %v730 = vpop.f32.mrb[0].mxu0
        %v731 = vpop.f32.mrb[0].mxu0
        %v732 = vadd.f32 0.0, %v731
        %v733 = vpop.f32.mrb[0].mxu0
        %734 = vdwg.mxu0
        %v735 = vmax.f32 %v609, 0.0
        %v736 = vmax.f32 %v612, 0.0
        %v737 = vmax.f32 %v617, 0.0
        %v738 = vmax.f32 %v620, 0.0
        %v739 = vmax.f32 %v625, 0.0
        %v740 = vmax.f32 %v628, 0.0
        %v741 = vmax.f32 %v633, 0.0
        %v742 = vmax.f32 %v636, 0.0
        %v743 = vmax.f32 %v641, 0.0
        %v744 = vmax.f32 %v644, 0.0
        %v745 = vmax.f32 %v649, 0.0
        %v746 = vmax.f32 %v652, 0.0
        %v747 = vmax.f32 %v657, 0.0
        %v748 = vmax.f32 %v660, 0.0
        %v749 = vmax.f32 %v665, 0.0
        %v750 = vmax.f32 %v668, 0.0
        %v751 = vmax.f32 %v673, 0.0
        %v752 = vmax.f32 %v676, 0.0
        %v753 = vmax.f32 %v681, 0.0
        %v754 = vmax.f32 %v684, 0.0
        %v755 = vmax.f32 %v689, 0.0
        %v756 = vmax.f32 %v692, 0.0
        %v757 = vmax.f32 %v697, 0.0
        %v758 = vmax.f32 %v700, 0.0
        %v759 = vmax.f32 %v705, 0.0
        %v760 = vmax.f32 %v708, 0.0
        %v761 = vmax.f32 %v713, 0.0
        %v762 = vmax.f32 %v716, 0.0
        %v763 = vmax.f32 %v721, 0.0
        %v764 = vmax.f32 %v724, 0.0
        %v765 = vmax.f32 %v729, 0.0
        %v766 = vmax.f32 %v732, 0.0
        %v767 = vpack.c.bf16 %v736, %v735
        %v768 = vpack.c.bf16 %v738, %v737
        %v769 = vpack.c.bf16 %v740, %v739
        %v770 = vpack.c.bf16 %v742, %v741
        %v771 = vpack.c.bf16 %v744, %v743
        %v772 = vpack.c.bf16 %v746, %v745
        %v773 = vpack.c.bf16 %v748, %v747
        %v774 = vpack.c.bf16 %v750, %v749
        %v775 = vpack.c.bf16 %v752, %v751
        %v776 = vpack.c.bf16 %v754, %v753
        %v777 = vpack.c.bf16 %v756, %v755
        %v778 = vpack.c.bf16 %v758, %v757
        %v779 = vpack.c.bf16 %v760, %v759
        %v780 = vpack.c.bf16 %v762, %v761
        %v781 = vpack.c.bf16 %v764, %v763
        %v782 = vpack.c.bf16 %v766, %v765
        %v783 = vld [vmem:[%s3] sm:$0x3]
        %v786 = vunpack.c.l.s4 1966171168
        %v787 = vunpack.c.0.s8 %v786
        %v788 = vlaneseq
        %v789 = vshrl.u32 %v788, 7
        %v790 = vsub.s32 %v787, %v789
        %v791 = vrot.slane %v783, %v790
        %v792 = vcombine.high %v791, %v791
        %v794 = vunpack.c.l.s4 1966171168
        %v795 = vunpack.c.0.s8 %v794
        %v796 = vlaneseq
        %v797 = vshrl.u32 %v796, 7
        %v798 = vsub.s32 %v795, %v797
        %v799 = vrot.slane %v791, %v798
        %v801 = vunpack.c.l.s4 1966171168
        %v802 = vunpack.c.0.s8 %v801
        %v803 = vlaneseq
        %v804 = vshrl.u32 %v803, 7
        %v805 = vsub.s32 %v802, %v804
        %v806 = vrot.slane %v792, %v805
        %809 = vmatprep.subr.bf16.mxu0 0
        %810 = vmatpush1.bf16.msra.mxu0 %v767
        %811 = vmatprep.subr.bf16.mxu0 0
        %812 = vmatpush1.bf16.msra.mxu0 %v768
        %813 = vmatprep.subr.bf16.mxu0 0
        %814 = vmatpush1.bf16.msra.mxu0 %v769
        %815 = vmatprep.subr.bf16.mxu0 0
        %816 = vmatpush1.bf16.msra.mxu0 %v770
        %817 = vmatprep.subr.bf16.mxu0 0
        %818 = vmatpush1.bf16.msra.mxu0 %v771
        %819 = vmatprep.subr.bf16.mxu0 0
        %820 = vmatpush1.bf16.msra.mxu0 %v772
        %821 = vmatprep.subr.bf16.mxu0 0
        %822 = vmatpush1.bf16.msra.mxu0 %v773
        %823 = vmatprep.subr.bf16.mxu0 0
        %824 = vmatpush1.bf16.msra.mxu0 %v774
        %825 = vmatprep.subr.bf16.mxu0 0
        %826 = vmatpush1.bf16.msra.mxu0 %v775
        %827 = vmatprep.subr.bf16.mxu0 0
        %828 = vmatpush1.bf16.msra.mxu0 %v776
        %829 = vmatprep.subr.bf16.mxu0 0
        %830 = vmatpush1.bf16.msra.mxu0 %v777
        %831 = vmatprep.subr.bf16.mxu0 0
        %832 = vmatpush1.bf16.msra.mxu0 %v778
        %833 = vmatprep.subr.bf16.mxu0 0
        %834 = vmatpush1.bf16.msra.mxu0 %v779
        %835 = vmatprep.subr.bf16.mxu0 0
        %836 = vmatpush1.bf16.msra.mxu0 %v780
        %837 = vmatprep.subr.bf16.mxu0 0
        %838 = vmatpush1.bf16.msra.mxu0 %v781
        %839 = vmatprep.subr.bf16.mxu0 0
        %840 = vmatpush1.bf16.msra.mxu0 %v782
        %841 = vmatprep.mubr.bf16.mxu0 %v806
        %842 = vmatmul.mubr.bf16.gmra.mrb[0].mxu0 %v799
        %v843 = vpop.f32.mrb[0].mxu0
        %v844 = vadd.f32 0.0, %v843
        %v845 = vpop.f32.mrb[0].mxu0
        %v846 = vpop.f32.mrb[0].mxu0
        %v847 = vpop.f32.mrb[0].mxu0
        %848 = vdwg.mxu0
        %v849 = vpack.c.bf16 %v844, %v844
        %v850 = vld [vmem:[%s4] sm:$0xf]
        %v851 = vld [vmem:[%s4 + $0x4] sm:$0xf]
        %v852 = vld [vmem:[%s4 + $0x8] sm:$0xf]
        %v853 = vld [vmem:[%s4 + $0xc] sm:$0xf]
        %v854 = vld [vmem:[%s4 + $0x10] sm:$0xf]
        %v855 = vld [vmem:[%s4 + $0x14] sm:$0xf]
        %v856 = vld [vmem:[%s4 + $0x18] sm:$0xf]
        %v857 = vld [vmem:[%s4 + $0x1c] sm:$0xf]
        %v858 = vld [vmem:[%s4 + $0x20] sm:$0xf]
        %v859 = vld [vmem:[%s4 + $0x24] sm:$0xf]
        %v860 = vld [vmem:[%s4 + $0x28] sm:$0xf]
        %v861 = vld [vmem:[%s4 + $0x2c] sm:$0xf]
        %v862 = vld [vmem:[%s4 + $0x30] sm:$0xf]
        %v863 = vld [vmem:[%s4 + $0x34] sm:$0xf]
        %v864 = vld [vmem:[%s4 + $0x38] sm:$0xf]
        %v865 = vld [vmem:[%s4 + $0x3c] sm:$0xf]
        %v866 = vld [vmem:[%s380] sm:$0x1]
        %v867 = vpack.c.bf16 %v866, %v866
        %v868 = vld [vmem:[%s5] sm:$0xf]
        %v869 = vld [vmem:[%s5 + $0x4] sm:$0xf]
        %v870 = vld [vmem:[%s5 + $0x8] sm:$0xf]
        %v871 = vld [vmem:[%s5 + $0xc] sm:$0xf]
        %v872 = vld [vmem:[%s5 + $0x10] sm:$0xf]
        %v873 = vld [vmem:[%s5 + $0x14] sm:$0xf]
        %v874 = vld [vmem:[%s5 + $0x18] sm:$0xf]
        %v875 = vld [vmem:[%s5 + $0x1c] sm:$0xf]
        %v876 = vld [vmem:[%s5 + $0x20] sm:$0xf]
        %v877 = vld [vmem:[%s5 + $0x24] sm:$0xf]
        %v878 = vld [vmem:[%s5 + $0x28] sm:$0xf]
        %v879 = vld [vmem:[%s5 + $0x2c] sm:$0xf]
        %v880 = vld [vmem:[%s5 + $0x30] sm:$0xf]
        %v881 = vld [vmem:[%s5 + $0x34] sm:$0xf]
        %v882 = vld [vmem:[%s5 + $0x38] sm:$0xf]
        %v883 = vld [vmem:[%s5 + $0x3c] sm:$0xf]
        %v900 = vunpack.c.l.b16 %v868
        %v901 = vunpack.c.l.b16 %v869
        %v902 = vunpack.c.l.b16 %v870
        %v903 = vunpack.c.l.b16 %v871
        %v904 = vunpack.c.l.b16 %v872
        %v905 = vunpack.c.l.b16 %v873
        %v906 = vunpack.c.l.b16 %v874
        %v907 = vunpack.c.l.b16 %v875
        %v908 = vunpack.c.l.b16 %v876
        %v909 = vunpack.c.l.b16 %v877
        %v910 = vunpack.c.l.b16 %v878
        %v911 = vunpack.c.l.b16 %v879
        %v912 = vunpack.c.l.b16 %v880
        %v913 = vunpack.c.l.b16 %v881
        %v914 = vunpack.c.l.b16 %v882
        %v915 = vunpack.c.l.b16 %v883
        %v916 = vpack.c.b16 %v901, %v900
        %v917 = vpack.c.b16 %v903, %v902
        %v918 = vpack.c.b16 %v905, %v904
        %v919 = vpack.c.b16 %v907, %v906
        %v920 = vpack.c.b16 %v909, %v908
        %v921 = vpack.c.b16 %v911, %v910
        %v922 = vpack.c.b16 %v913, %v912
        %v923 = vpack.c.b16 %v915, %v914
        %932 = vmatprep.subr.bf16.mxu0 0
        %933 = vmatpush1.bf16.msra.mxu0 %v916
        %934 = vmatprep.subr.bf16.mxu0 0
        %935 = vmatpush1.bf16.msra.mxu0 %v917
        %936 = vmatprep.subr.bf16.mxu0 0
        %937 = vmatpush1.bf16.msra.mxu0 %v918
        %938 = vmatprep.subr.bf16.mxu0 0
        %939 = vmatpush1.bf16.msra.mxu0 %v919
        %940 = vmatprep.subr.bf16.mxu0 0
        %941 = vmatpush1.bf16.msra.mxu0 %v920
        %942 = vmatprep.subr.bf16.mxu0 0
        %943 = vmatpush1.bf16.msra.mxu0 %v921
        %944 = vmatprep.subr.bf16.mxu0 0
        %945 = vmatpush1.bf16.msra.mxu0 %v922
        %946 = vmatprep.subr.bf16.mxu0 0
        %947 = vmatpush1.bf16.msra.mxu0 %v923
        %948 = vmatprep.subr.bf16.mxu0 0
        %949 = vmatpush1.bf16.msra.mxu0 0
        %950 = vmatprep.subr.bf16.mxu0 0
        %951 = vmatpush1.bf16.msra.mxu0 0
        %952 = vmatprep.subr.bf16.mxu0 0
        %953 = vmatpush1.bf16.msra.mxu0 0
        %954 = vmatprep.subr.bf16.mxu0 0
        %955 = vmatpush1.bf16.msra.mxu0 0
        %956 = vmatprep.subr.bf16.mxu0 0
        %957 = vmatpush1.bf16.msra.mxu0 0
        %958 = vmatprep.subr.bf16.mxu0 0
        %959 = vmatpush1.bf16.msra.mxu0 0
        %960 = vmatprep.subr.bf16.mxu0 0
        %961 = vmatpush1.bf16.msra.mxu0 0
        %962 = vmatprep.subr.bf16.mxu0 0
        %963 = vmatpush1.bf16.msra.mxu0 0
        %964 = vmatprep.mubr.bf16.mxu0 0
        %965 = vmatmul.mubr.bf16.gmra.mrb[0].mxu0 %v867
        %v966 = vpop.f32.mrb[0].mxu0
        %v967 = vadd.f32 0.0, %v966
        %v968 = vpop.f32.mrb[0].mxu0
        %v969 = vpop.f32.mrb[0].mxu0
        %v970 = vpop.f32.mrb[0].mxu0
        %971 = vdwg.mxu0
        %v988 = vunpack.c.l.b16 %v850
        %v989 = vunpack.c.l.b16 %v851
        %v990 = vunpack.c.l.b16 %v852
        %v991 = vunpack.c.l.b16 %v853
        %v992 = vunpack.c.l.b16 %v854
        %v993 = vunpack.c.l.b16 %v855
        %v994 = vunpack.c.l.b16 %v856
        %v995 = vunpack.c.l.b16 %v857
        %v996 = vunpack.c.l.b16 %v858
        %v997 = vunpack.c.l.b16 %v859
        %v998 = vunpack.c.l.b16 %v860
        %v999 = vunpack.c.l.b16 %v861
        %v1000 = vunpack.c.l.b16 %v862
        %v1001 = vunpack.c.l.b16 %v863
        %v1002 = vunpack.c.l.b16 %v864
        %v1003 = vunpack.c.l.b16 %v865
        %v1004 = vpack.c.b16 %v989, %v988
        %v1005 = vpack.c.b16 %v991, %v990
        %v1006 = vpack.c.b16 %v993, %v992
        %v1007 = vpack.c.b16 %v995, %v994
        %v1008 = vpack.c.b16 %v997, %v996
        %v1009 = vpack.c.b16 %v999, %v998
        %v1010 = vpack.c.b16 %v1001, %v1000
        %v1011 = vpack.c.b16 %v1003, %v1002
        %1020 = vmatprep.subr.bf16.mxu0 0
        %1021 = vmatpush1.bf16.msra.mxu0 %v1004
        %1022 = vmatprep.subr.bf16.mxu0 0
        %1023 = vmatpush1.bf16.msra.mxu0 %v1005
        %1024 = vmatprep.subr.bf16.mxu0 0
        %1025 = vmatpush1.bf16.msra.mxu0 %v1006
        %1026 = vmatprep.subr.bf16.mxu0 0
        %1027 = vmatpush1.bf16.msra.mxu0 %v1007
        %1028 = vmatprep.subr.bf16.mxu0 0
        %1029 = vmatpush1.bf16.msra.mxu0 %v1008
        %1030 = vmatprep.subr.bf16.mxu0 0
        %1031 = vmatpush1.bf16.msra.mxu0 %v1009
        %1032 = vmatprep.subr.bf16.mxu0 0
        %1033 = vmatpush1.bf16.msra.mxu0 %v1010
        %1034 = vmatprep.subr.bf16.mxu0 0
        %1035 = vmatpush1.bf16.msra.mxu0 %v1011
        %1036 = vmatprep.subr.bf16.mxu0 0
        %1037 = vmatpush1.bf16.msra.mxu0 0
        %1038 = vmatprep.subr.bf16.mxu0 0
        %1039 = vmatpush1.bf16.msra.mxu0 0
        %1040 = vmatprep.subr.bf16.mxu0 0
        %1041 = vmatpush1.bf16.msra.mxu0 0
        %1042 = vmatprep.subr.bf16.mxu0 0
        %1043 = vmatpush1.bf16.msra.mxu0 0
        %1044 = vmatprep.subr.bf16.mxu0 0
        %1045 = vmatpush1.bf16.msra.mxu0 0
        %1046 = vmatprep.subr.bf16.mxu0 0
        %1047 = vmatpush1.bf16.msra.mxu0 0
        %1048 = vmatprep.subr.bf16.mxu0 0
        %1049 = vmatpush1.bf16.msra.mxu0 0
        %1050 = vmatprep.subr.bf16.mxu0 0
        %1051 = vmatpush1.bf16.msra.mxu0 0
        %1052 = vmatprep.mubr.bf16.mxu0 0
        %1053 = vmatmul.mubr.bf16.gmra.mrb[0].mxu0 %v849
        %v1054 = vpop.f32.mrb[0].mxu0
        %v1055 = vadd.f32 %v967, %v1054
        %v1056 = vpop.f32.mrb[0].mxu0
        %v1057 = vpop.f32.mrb[0].mxu0
        %v1058 = vpop.f32.mrb[0].mxu0
        %1059 = vdwg.mxu0
        %v1060 = vld [vmem:[%s6] sm:$0x1]
        %v1061 = vadd.f32 %v1055, %v1060
        %v1062 = vtanh.pop %v1061
        %1063 = vst [vmem:[%s372] sm:$0x1] %v1062
        %v1064 = vpack.c.bf16 %v1062, %v1062
        %v1065 = vld [vmem:[%s7] sm:$0xf]
        %v1066 = vld [vmem:[%s7 + $0x4] sm:$0xf]
        %v1067 = vld [vmem:[%s7 + $0x8] sm:$0xf]
        %v1068 = vld [vmem:[%s7 + $0xc] sm:$0xf]
        %v1069 = vld [vmem:[%s7 + $0x10] sm:$0xf]
        %v1070 = vld [vmem:[%s7 + $0x14] sm:$0xf]
        %v1071 = vld [vmem:[%s7 + $0x18] sm:$0xf]
        %v1072 = vld [vmem:[%s7 + $0x1c] sm:$0xf]
        %v1073 = vld [vmem:[%s7 + $0x20] sm:$0xf]
        %v1074 = vld [vmem:[%s7 + $0x24] sm:$0xf]
        %v1075 = vld [vmem:[%s7 + $0x28] sm:$0xf]
        %v1076 = vld [vmem:[%s7 + $0x2c] sm:$0xf]
        %v1077 = vld [vmem:[%s7 + $0x30] sm:$0xf]
        %v1078 = vld [vmem:[%s7 + $0x34] sm:$0xf]
        %v1079 = vld [vmem:[%s7 + $0x38] sm:$0xf]
        %v1080 = vld [vmem:[%s7 + $0x3c] sm:$0xf]
        %v1081 = vld [vmem:[%s8] sm:$0x1]
        %v1098 = vunpack.c.l.b16 %v1065
        %v1099 = vunpack.c.l.b16 %v1066
        %v1100 = vunpack.c.l.b16 %v1067
        %v1101 = vunpack.c.l.b16 %v1068
        %v1102 = vunpack.c.l.b16 %v1069
        %v1103 = vunpack.c.l.b16 %v1070
        %v1104 = vunpack.c.l.b16 %v1071
        %v1105 = vunpack.c.l.b16 %v1072
        %v1106 = vunpack.c.l.b16 %v1073
        %v1107 = vunpack.c.l.b16 %v1074
        %v1108 = vunpack.c.l.b16 %v1075
        %v1109 = vunpack.c.l.b16 %v1076
        %v1110 = vunpack.c.l.b16 %v1077
        %v1111 = vunpack.c.l.b16 %v1078
        %v1112 = vunpack.c.l.b16 %v1079
        %v1113 = vunpack.c.l.b16 %v1080
        %v1114 = vpack.c.b16 %v1099, %v1098
        %v1115 = vpack.c.b16 %v1101, %v1100
        %v1116 = vpack.c.b16 %v1103, %v1102
        %v1117 = vpack.c.b16 %v1105, %v1104
        %v1118 = vpack.c.b16 %v1107, %v1106
        %v1119 = vpack.c.b16 %v1109, %v1108
        %v1120 = vpack.c.b16 %v1111, %v1110
        %v1121 = vpack.c.b16 %v1113, %v1112
        %1130 = vmatprep.subr.bf16.mxu0 0
        %1131 = vmatpush1.bf16.msra.mxu0 %v1114
        %1132 = vmatprep.subr.bf16.mxu0 0
        %1133 = vmatpush1.bf16.msra.mxu0 %v1115
        %1134 = vmatprep.subr.bf16.mxu0 0
        %1135 = vmatpush1.bf16.msra.mxu0 %v1116
        %1136 = vmatprep.subr.bf16.mxu0 0
        %1137 = vmatpush1.bf16.msra.mxu0 %v1117
        %1138 = vmatprep.subr.bf16.mxu0 0
        %1139 = vmatpush1.bf16.msra.mxu0 %v1118
        %1140 = vmatprep.subr.bf16.mxu0 0
        %1141 = vmatpush1.bf16.msra.mxu0 %v1119
        %1142 = vmatprep.subr.bf16.mxu0 0
        %1143 = vmatpush1.bf16.msra.mxu0 %v1120
        %1144 = vmatprep.subr.bf16.mxu0 0
        %1145 = vmatpush1.bf16.msra.mxu0 %v1121
        %1146 = vmatprep.subr.bf16.mxu0 0
        %1147 = vmatpush1.bf16.msra.mxu0 0
        %1148 = vmatprep.subr.bf16.mxu0 0
        %1149 = vmatpush1.bf16.msra.mxu0 0
        %1150 = vmatprep.subr.bf16.mxu0 0
        %1151 = vmatpush1.bf16.msra.mxu0 0
        %1152 = vmatprep.subr.bf16.mxu0 0
        %1153 = vmatpush1.bf16.msra.mxu0 0
        %1154 = vmatprep.subr.bf16.mxu0 0
        %1155 = vmatpush1.bf16.msra.mxu0 0
        %1156 = vmatprep.subr.bf16.mxu0 0
        %1157 = vmatpush1.bf16.msra.mxu0 0
        %1158 = vmatprep.subr.bf16.mxu0 0
        %1159 = vmatpush1.bf16.msra.mxu0 0
        %1160 = vmatprep.subr.bf16.mxu0 0
        %1161 = vmatpush1.bf16.msra.mxu0 0
        %1162 = vmatprep.mubr.bf16.mxu0 0
        %1163 = vmatmul.mubr.bf16.gmra.mrb[0].mxu0 %v1064
        %v1164 = vpop.f32.mrb[0].mxu0
        %v1165 = vadd.f32 %v1081, %v1164
        %v1166 = vpop.f32.mrb[0].mxu0
        %v1167 = vpop.f32.mrb[0].mxu0
        %v1168 = vpop.f32.mrb[0].mxu0
        %1169 = vdwg.mxu0
        %1170 = vst [vmem:[%s366] sm:$0x1] %v1165
        %s1171 = sand.u32 %s235, 1
        %s1172 = scalar_lea.sflag [#allocation3], %s1171
        %s1173 = sand.u32 %s235, 1
        %s1174 = scalar_lea.vmem [#allocation2], %s1173
        %s1175 = sand.u32 %s261, 1
        %s1176 = scalar_lea.sflag [#allocation5], %s1175
        %s1177 = sand.u32 %s261, 1
        %s1178 = scalar_lea.vmem [#allocation4], %s1177
        // Predicated region
        $region57: #{detectnet_forward.1} parent=55 // pred_check
          %p1179 = pneg %p245
        $region58: #{detectnet_forward.1} parent=55 // pred_check_branch
          %1181 = sbr.rel (%p1179) target = $region60
        $region59: #{detectnet_forward.1} parent=55 // pred_region
          %s1183 = ssub.s32 16, 16
          %1184 = vsyncadd %s1172, %s1183
          %s1185 = smul.addr %s28, 16
          %s1186 = scalar_lea.hbm %s9, %s1185
          %s1188 = sshll.u32 %s1174, 4
          %s1189 = int_to_ptr.vmem [resolvable:$true] %s1188
          %1191 = dma.vmem_to_hbm [thread:$0]  %s1189, 16, %s1186, %s1172
        $region60: #{detectnet_forward.1} parent=55 // pred_fallthru
          _
        // Predicated region
        $region61: #{detectnet_forward.1} parent=55 // pred_check
          %p1192 = pneg %p271
        $region62: #{detectnet_forward.1} parent=55 // pred_check_branch
          %1194 = sbr.rel (%p1192) target = $region64
        $region63: #{detectnet_forward.1} parent=55 // pred_region
          %s1196 = ssub.s32 16, 16
          %1197 = vsyncadd %s1176, %s1196
          %s1198 = smul.addr %s28, 16
          %s1199 = scalar_lea.hbm %s10, %s1198
          %s1201 = sshll.u32 %s1178, 4
          %s1202 = int_to_ptr.vmem [resolvable:$true] %s1201
          %1204 = dma.vmem_to_hbm [thread:$0]  %s1202, 16, %s1199, %s1176
        $region64: #{detectnet_forward.1} parent=55 // pred_fallthru
          _
      $region56: #{detectnet_forward.1} parent=5 // pred_fallthru
        _
      %p1205 = scmp.le.s32.totalorder 2, %s23
      // Predicated region
      $region65: #{detectnet_forward.1} parent=5 // pred_check
        %p1206 = pneg %p1205
      $region66: #{detectnet_forward.1} parent=5 // pred_check_branch
        %1208 = sbr.rel (%p1206) target = $region68
      $region67: #{detectnet_forward.1} parent=5 // pred_region
        %s1209 = ssub.s32 %s23, 2
        // Predicated region
        $region69: #{detectnet_forward.1} parent=67 // pred_check
          %p1210 = pneg %p251
        $region70: #{detectnet_forward.1} parent=67 // pred_check_branch
          %1212 = sbr.rel (%p1210) target = $region72
        $region71: #{detectnet_forward.1} parent=67 // pred_region
          %s1213 = sand.u32 %s236, 1
          %s1214 = scalar_lea.sflag [#allocation3], %s1213
          %s1215 = sand.u32 %s236, 1
          %s1216 = scalar_lea.vmem [#allocation2], %s1215
          %1217 = dma.done %s1214, 16
        $region72: #{detectnet_forward.1} parent=67 // pred_fallthru
          _
        // Predicated region
        $region73: #{detectnet_forward.1} parent=67 // pred_check
          %p1218 = pneg %p277
        $region74: #{detectnet_forward.1} parent=67 // pred_check_branch
          %1220 = sbr.rel (%p1218) target = $region76
        $region75: #{detectnet_forward.1} parent=67 // pred_region
          %s1221 = sand.u32 %s262, 1
          %s1222 = scalar_lea.sflag [#allocation5], %s1221
          %s1223 = sand.u32 %s262, 1
          %s1224 = scalar_lea.vmem [#allocation4], %s1223
          %1225 = dma.done %s1222, 16
        $region76: #{detectnet_forward.1} parent=67 // pred_fallthru
          _
      $region68: #{detectnet_forward.1} parent=5 // pred_fallthru
        _
    $region6: #{detectnet_forward.1} parent=1 // loop_footer
      %s27 = sadd.s32 1, %s23
    $region7: #{detectnet_forward.1} parent=1 // loop_footer_branch
      %22 = sbr.rel target = $region3
    $region8: #{detectnet_forward.1} parent=1 // loop_exit
      _
    %1226 = vsyncpa [#allocation3], 1
    %s1227 = scalar_lea.sflag [#allocation3], 1
    %1228 = vsyncpa %s1227, 1
    %1229 = vsyncpa [#allocation5], 1
    %s1230 = scalar_lea.sflag [#allocation5], 1
    %1231 = vsyncpa %s1230, 1

</llo_original>
